<compile_context>
chip_gen: v5e
topology: v5e:2x2
jax: 0.10.0
libtpu: 0.0.40
codegen_flags: <defaults>
</compile_context>

<pallas_src>
import jax
import jax.numpy as jnp
from jax.experimental import pallas as pl
from jax.experimental.pallas import tpu as pltpu

BN_EPS = 1e-5


def info_kernel(x_ref, w1_ref, w2_ref, vec_ref, out_ref):
    # ---- Linear 1 (bias-free; bias cancels under the BN mean subtraction) ----
    x = x_ref[...]                                    # (B, In)
    h = jax.lax.dot_general(
        x, w1_ref[...],                               # (H, In) native layout
        dimension_numbers=(((1,), (1,)), ((), ())),
        preferred_element_type=jnp.float32)           # (B, H)

    # ---- BatchNorm1d (training mode: batch stats, biased variance) ----
    b = h.shape[0]
    inv_b = 1.0 / b
    s1 = jnp.sum(h, axis=0, keepdims=True)            # (1, H)  \ both XLU
    s2 = jnp.sum(h * h, axis=0, keepdims=True)        # (1, H)  / reduces overlap
    mean = s1 * inv_b
    var = s2 * inv_b - mean * mean                    # biased variance
    inv_std = jax.lax.rsqrt(var + BN_EPS)             # EUP

    H = h.shape[1]
    O = out_ref.shape[1]
    gamma = vec_ref[0:1, :H]                          # (1, H)
    beta = vec_ref[1:2, :H]                           # (1, H)
    b2 = vec_ref[2:3, :O]                             # (1, O)

    scale = inv_std * gamma                           # (1, H) — gamma folded in
    hn = (h - mean) * scale + beta                    # (B, H)

    # ---- tanh (EUP) ----
    t = jnp.tanh(hn)

    # ---- Linear 2 + sigmoid ----
    o = jax.lax.dot_general(
        t, w2_ref[...],                               # (O, H) native layout
        dimension_numbers=(((1,), (1,)), ((), ())),
        preferred_element_type=jnp.float32)           # (B, O)
    o = o + b2
    out_ref[...] = jax.nn.sigmoid(o).astype(out_ref.dtype)


def info_forward(x, w1, b1, gamma, beta, w2, b2):
    """x: (B, input_size). Weights kept in PyTorch (out, in) layout.

    b1 is accepted for interface fidelity but intentionally NOT fed to the
    kernel: BatchNorm's mean subtraction cancels it exactly.
    """
    del b1  # exact cancellation under the immediately-following BatchNorm
    B, In = x.shape
    H = w1.shape[0]
    O = w2.shape[0]
    P = max(H, O)

    # Pack the small per-feature vectors into one VMEM operand (one DMA,
    # one padded buffer, instead of three).
    vec = jnp.zeros((3, P), dtype=jnp.float32)
    vec = vec.at[0, :H].set(gamma.astype(jnp.float32))
    vec = vec.at[1, :H].set(beta.astype(jnp.float32))
    vec = vec.at[2, :O].set(b2.astype(jnp.float32))

    cost = pl.CostEstimate(
        flops=2 * B * (In * H + H * O),
        transcendentals=B * (H + O),
        bytes_accessed=4 * (x.size + w1.size + w2.size + vec.size + B * O),
    )

    # Small problem: whole arrays fit in VMEM -> single-block kernel, no grid.
    # TODO(synk): for large production batches, tile B over a ("parallel",)
    # grid and compute BN stats in a preceding "arbitrary" pass.
    vspec = pl.BlockSpec(memory_space=pltpu.VMEM)
    return pl.pallas_call(
        info_kernel,
        out_shape=jax.ShapeDtypeStruct((B, O), jnp.float32),
        in_specs=[vspec] * 4,
        out_specs=vspec,
        cost_estimate=cost,
    )(x, w1, w2, vec)


def reference_forward(x, w1, b1, gamma, beta, w2, b2):
    h = x @ w1.T + b1
    mean = jnp.mean(h, axis=0, keepdims=True)
    var = jnp.mean((h - mean) ** 2, axis=0, keepdims=True)
    hn = (h - mean) / jnp.sqrt(var + BN_EPS) * gamma + beta
    t = jnp.tanh(hn)
    return jax.nn.sigmoid(t @ w2.T + b2)


if __name__ == "__main__":
    # Module hyperparameters (small, consistent with the forward pass).
    input_size, hidden_size, output_size = 32, 32, 16
    batch = 8

    key = jax.random.PRNGKey(0)
    kx, kw1, kb1, kw2, kb2 = jax.random.split(key, 5)

    x = jax.random.normal(kx, (batch, input_size), dtype=jnp.float32)

    # Deterministic parameter init (PyTorch Linear-style uniform bounds).
    lim1 = 1.0 / jnp.sqrt(jnp.float32(input_size))
    w1 = jax.random.uniform(kw1, (hidden_size, input_size),
                            minval=-lim1, maxval=lim1, dtype=jnp.float32)
    b1 = jax.random.uniform(kb1, (hidden_size,),
                            minval=-lim1, maxval=lim1, dtype=jnp.float32)

    lim2 = 1.0 / jnp.sqrt(jnp.float32(hidden_size))
    w2 = jax.random.uniform(kw2, (output_size, hidden_size),
                            minval=-lim2, maxval=lim2, dtype=jnp.float32)
    b2 = jax.random.uniform(kb2, (output_size,),
                            minval=-lim2, maxval=lim2, dtype=jnp.float32)

    # BatchNorm1d default init: gamma=1, beta=0 (kept general in the kernel).
    gamma = jnp.ones((hidden_size,), dtype=jnp.float32)
    beta = jnp.zeros((hidden_size,), dtype=jnp.float32)

    out = info_forward(x, w1, b1, gamma, beta, w2, b2)
    out = jax.block_until_ready(out)

    ref = reference_forward(x, w1, b1, gamma, beta, w2, b2)
    assert out.shape == (batch, output_size)
    assert jnp.allclose(out, ref, atol=1e-5, rtol=1e-5), "mismatch vs reference"

    print("KERNEL_OK")
</pallas_src>

<mosaic_0001>
module attributes {stable_mosaic.version = 11 : i64} {
  func.func @info_kernel(%arg0: memref<8x32xf32, #tpu.memory_space<vmem>>, %arg1: memref<32x32xf32, #tpu.memory_space<vmem>>, %arg2: memref<16x32xf32, #tpu.memory_space<vmem>>, %arg3: memref<3x32xf32, #tpu.memory_space<vmem>>, %arg4: memref<8x16xf32, #tpu.memory_space<vmem>>) attributes {dimension_semantics = [], scalar_prefetch = 0 : i64, scratch_operands = 0 : i64, tpu.core_type = #tpu.core_type<tc>} {
    %c0 = arith.constant 0 : index
    %c0_0 = arith.constant 0 : index
    %0 = vector.load %arg0[%c0, %c0_0] : memref<8x32xf32, #tpu.memory_space<vmem>>, vector<8x32xf32>
    %c0_1 = arith.constant 0 : index
    %c0_2 = arith.constant 0 : index
    %1 = vector.load %arg1[%c0_1, %c0_2] : memref<32x32xf32, #tpu.memory_space<vmem>>, vector<32x32xf32>
    %cst = arith.constant dense<0.000000e+00> : vector<8x32xf32>
    %2 = tpu.matmul %0, %1, %cst {dimension_numbers = #tpu.dot_dimension_numbers<[1], [1], [0], [0], [0, 0, 1, 0], [], []>} : vector<8x32xf32>, vector<32x32xf32>, vector<8x32xf32> -> vector<8x32xf32>
    %cst_3 = arith.constant dense<0.000000e+00> : vector<32xf32>
    %3 = vector.multi_reduction <add>, %2, %cst_3 [0] : vector<8x32xf32> to vector<32xf32>
    %4 = vector.shape_cast %3 : vector<32xf32> to vector<1x32xf32>
    %5 = arith.mulf %2, %2 : vector<8x32xf32>
    %cst_4 = arith.constant dense<0.000000e+00> : vector<32xf32>
    %6 = vector.multi_reduction <add>, %5, %cst_4 [0] : vector<8x32xf32> to vector<32xf32>
    %7 = vector.shape_cast %6 : vector<32xf32> to vector<1x32xf32>
    %cst_5 = arith.constant 1.250000e-01 : f32
    %8 = vector.broadcast %cst_5 : f32 to vector<1x32xf32>
    %9 = arith.mulf %4, %8 : vector<1x32xf32>
    %cst_6 = arith.constant 1.250000e-01 : f32
    %10 = vector.broadcast %cst_6 : f32 to vector<1x32xf32>
    %11 = arith.mulf %7, %10 : vector<1x32xf32>
    %12 = arith.mulf %9, %9 : vector<1x32xf32>
    %13 = arith.subf %11, %12 : vector<1x32xf32>
    %cst_7 = arith.constant 9.99999974E-6 : f32
    %14 = vector.broadcast %cst_7 : f32 to vector<1x32xf32>
    %15 = arith.addf %13, %14 : vector<1x32xf32>
    %16 = math.rsqrt %15 : vector<1x32xf32>
    %c0_8 = arith.constant 0 : index
    %c0_9 = arith.constant 0 : index
    %17 = vector.load %arg3[%c0_8, %c0_9] : memref<3x32xf32, #tpu.memory_space<vmem>>, vector<1x32xf32>
    %c1 = arith.constant 1 : index
    %c0_10 = arith.constant 0 : index
    %18 = vector.load %arg3[%c1, %c0_10] : memref<3x32xf32, #tpu.memory_space<vmem>>, vector<1x32xf32>
    %c2 = arith.constant 2 : index
    %c0_11 = arith.constant 0 : index
    %19 = vector.load %arg3[%c2, %c0_11] : memref<3x32xf32, #tpu.memory_space<vmem>>, vector<1x16xf32>
    %20 = arith.mulf %16, %17 : vector<1x32xf32>
    %21 = vector.broadcast %9 : vector<1x32xf32> to vector<8x32xf32>
    %22 = arith.subf %2, %21 : vector<8x32xf32>
    %23 = vector.broadcast %20 : vector<1x32xf32> to vector<8x32xf32>
    %24 = arith.mulf %22, %23 : vector<8x32xf32>
    %25 = vector.broadcast %18 : vector<1x32xf32> to vector<8x32xf32>
    %26 = arith.addf %24, %25 : vector<8x32xf32>
    %27 = math.tanh %26 : vector<8x32xf32>
    %c0_12 = arith.constant 0 : index
    %c0_13 = arith.constant 0 : index
    %28 = vector.load %arg2[%c0_12, %c0_13] : memref<16x32xf32, #tpu.memory_space<vmem>>, vector<16x32xf32>
    %cst_14 = arith.constant dense<0.000000e+00> : vector<8x16xf32>
    %29 = tpu.matmul %27, %28, %cst_14 {dimension_numbers = #tpu.dot_dimension_numbers<[1], [1], [0], [0], [0, 0, 1, 0], [], []>} : vector<8x32xf32>, vector<16x32xf32>, vector<8x16xf32> -> vector<8x16xf32>
    %30 = vector.broadcast %19 : vector<1x16xf32> to vector<8x16xf32>
    %31 = arith.addf %29, %30 : vector<8x16xf32>
    %32 = arith.negf %31 : vector<8x16xf32>
    %33 = math.exp %32 : vector<8x16xf32>
    %cst_15 = arith.constant 1.000000e+00 : f32
    %34 = vector.broadcast %cst_15 : f32 to vector<8x16xf32>
    %35 = arith.addf %34, %33 : vector<8x16xf32>
    %36 = arith.divf %34, %35 : vector<8x16xf32>
    %c0_16 = arith.constant 0 : index
    %c0_17 = arith.constant 0 : index
    %37 = vector.load %arg4[%c0_16, %c0_17] : memref<8x16xf32, #tpu.memory_space<vmem>>, vector<8x16xf32>
    tpu.vector_store %arg4[%c0_16, %c0_17], %36 {strides = array<i32>} : memref<8x16xf32, #tpu.memory_space<vmem>>, vector<8x16xf32>,
    return
  }
}

</mosaic_0001>

<llo_original>
// kernel: tpu_custom_call.1
$region0: #{tpu_custom_call.1}
  #allocation0 [shape = 'u32[]', space=smem, size = 0x4, offset = 0x4, fixed_abs, tag = 'smem constant byte address 0x4 - core index']
  #allocation1 [shape = 'u32[72,128]{1,0:T(1,128)}', space=vmem, size = 0x9000, scoped, tag = 'internal scratch']
  %s0 = inlined_call_operand.hbm [shape: f32[8,32], index: 0, kind: input, shape index: {}]
  %s1 = inlined_call_operand.hbm [shape: f32[32,32], index: 1, kind: input, shape index: {}]
  %s2 = inlined_call_operand.hbm [shape: f32[16,32], index: 2, kind: input, shape index: {}]
  %s3 = inlined_call_operand.hbm [shape: f32[3,32], index: 3, kind: input, shape index: {}]
  %s4 = inlined_call_operand.hbm [shape: f32[8,16], index: 4, kind: output, shape index: {}]
  %s5 = sld [smem:[#allocation0]]
  $region42: #{tpu_custom_call.1} parent=0
    _
  %s7 = ssub.s32 1, %s5
  %s8 = scalar_select 0, %s7, %s5
  $region1: #{tpu_custom_call.1} parent=0
    #allocation2 [shape = 'u8[4096]{0}', space=vmem, size = 0x1000, scoped, tag = 'input window, operand 0, single buffered']
    #allocation3 [shape = 's32[1]{0}', space=sflag, size = 0x4, scoped, tag = 'scoped memory for tpu_custom_call.1']
    #allocation4 [shape = 's32[1]{0}', space=sflag, size = 0x4, scoped, tag = 'scoped memory for tpu_custom_call.1']
    #allocation5 [shape = 'u8[16384]{0}', space=vmem, size = 0x4000, scoped, tag = 'input window, operand 1, single buffered']
    #allocation6 [shape = 's32[1]{0}', space=sflag, size = 0x4, scoped, tag = 'scoped memory for tpu_custom_call.1']
    #allocation7 [shape = 'u8[8192]{0}', space=vmem, size = 0x2000, scoped, tag = 'input window, operand 2, single buffered']
    #allocation8 [shape = 'u8[2048]{0}', space=vmem, size = 0x800, scoped, tag = 'input window, operand 3, single buffered']
    #allocation9 [shape = 's32[1]{0}', space=sflag, size = 0x4, scoped, tag = 'scoped memory for tpu_custom_call.1']
    #allocation10 [shape = 'u8[4096]{0}', space=vmem, size = 0x1000, scoped, tag = 'output window, operand 0, single buffered']
    %9 = vsyncpa [#allocation3], 0
    %10 = vsyncpa [#allocation6], 0
    %11 = vsyncpa [#allocation9], 0
    %12 = vsyncpa [#allocation4], 0
    // Predicated region
    $region2: #{tpu_custom_call.1} parent=1 // pred_check
      _
    $region3: #{tpu_custom_call.1} parent=1 // pred_check_branch
      %14 = sbr.rel (0) target = $region5
    $region4: #{tpu_custom_call.1} parent=1 // pred_region
      %16 = vsyncadd [#allocation3], 0
      %s18 = sshll.u32 %s0, 4
      %s19 = int_to_ptr.hbm [resolvable:$true] %s18
      %s20 = sshll.u32 [#allocation2], 4
      %s21 = int_to_ptr.vmem [resolvable:$true] %s20
      %23 = dma.hbm_to_vmem [thread:$0]  %s19, 128, %s21, [#allocation3]
    $region5: #{tpu_custom_call.1} parent=1 // pred_fallthru
      _
    // Predicated region
    $region6: #{tpu_custom_call.1} parent=1 // pred_check
      _
    $region7: #{tpu_custom_call.1} parent=1 // pred_check_branch
      %25 = sbr.rel (0) target = $region9
    $region8: #{tpu_custom_call.1} parent=1 // pred_region
      %27 = vsyncadd [#allocation6], 0
      %s28 = sshll.u32 %s1, 4
      %s29 = int_to_ptr.hbm [resolvable:$true] %s28
      %s30 = sshll.u32 [#allocation5], 4
      %s31 = int_to_ptr.vmem [resolvable:$true] %s30
      %36 = dma.hbm_to_vmem [thread:$0]  %s29, 512, %s31, [#allocation6], 128, 128, 8
    $region9: #{tpu_custom_call.1} parent=1 // pred_fallthru
      _
    // Predicated region
    $region10: #{tpu_custom_call.1} parent=1 // pred_check
      _
    $region11: #{tpu_custom_call.1} parent=1 // pred_check_branch
      %38 = sbr.rel (0) target = $region13
    $region12: #{tpu_custom_call.1} parent=1 // pred_region
      %40 = vsyncadd [#allocation6], 0
      %s41 = sshll.u32 %s2, 4
      %s42 = int_to_ptr.hbm [resolvable:$true] %s41
      %s43 = sshll.u32 [#allocation7], 4
      %s44 = int_to_ptr.vmem [resolvable:$true] %s43
      %49 = dma.hbm_to_vmem [thread:$0]  %s42, 256, %s44, [#allocation6], 128, 128, 8
    $region13: #{tpu_custom_call.1} parent=1 // pred_fallthru
      _
    // Predicated region
    $region14: #{tpu_custom_call.1} parent=1 // pred_check
      _
    $region15: #{tpu_custom_call.1} parent=1 // pred_check_branch
      %51 = sbr.rel (0) target = $region17
    $region16: #{tpu_custom_call.1} parent=1 // pred_region
      %53 = vsyncadd [#allocation9], 0
      %s55 = sshll.u32 %s3, 4
      %s56 = int_to_ptr.hbm [resolvable:$true] %s55
      %s57 = sshll.u32 [#allocation8], 4
      %s58 = int_to_ptr.vmem [resolvable:$true] %s57
      %60 = dma.hbm_to_vmem [thread:$0]  %s56, 64, %s58, [#allocation9]
    $region17: #{tpu_custom_call.1} parent=1 // pred_fallthru
      _
    // Predicated region
    $region18: #{tpu_custom_call.1} parent=1 // pred_check
      _
    $region19: #{tpu_custom_call.1} parent=1 // pred_check_branch
      %62 = sbr.rel (0) target = $region21
    $region20: #{tpu_custom_call.1} parent=1 // pred_region
      %64 = dma.done [#allocation3], 128
    $region21: #{tpu_custom_call.1} parent=1 // pred_fallthru
      _
    // Predicated region
    $region22: #{tpu_custom_call.1} parent=1 // pred_check
      _
    $region23: #{tpu_custom_call.1} parent=1 // pred_check_branch
      %66 = sbr.rel (0) target = $region25
    $region24: #{tpu_custom_call.1} parent=1 // pred_region
      %68 = dma.done [#allocation6], 512
    $region25: #{tpu_custom_call.1} parent=1 // pred_fallthru
      _
    // Predicated region
    $region26: #{tpu_custom_call.1} parent=1 // pred_check
      _
    $region27: #{tpu_custom_call.1} parent=1 // pred_check_branch
      %70 = sbr.rel (0) target = $region29
    $region28: #{tpu_custom_call.1} parent=1 // pred_region
      %72 = dma.done [#allocation6], 256
    $region29: #{tpu_custom_call.1} parent=1 // pred_fallthru
      _
    // Predicated region
    $region30: #{tpu_custom_call.1} parent=1 // pred_check
      _
    $region31: #{tpu_custom_call.1} parent=1 // pred_check_branch
      %74 = sbr.rel (0) target = $region33
    $region32: #{tpu_custom_call.1} parent=1 // pred_region
      %76 = dma.done [#allocation9], 64
    $region33: #{tpu_custom_call.1} parent=1 // pred_fallthru
      _
    %v77 = vld [vmem:[#allocation2] sm:$0xff]
    %v78 = vld [vmem:[#allocation5] sm:$0xff]
    %v79 = vld [vmem:[#allocation5 + $0x8] sm:$0xff]
    %v80 = vld [vmem:[#allocation5 + $0x10] sm:$0xff]
    %v81 = vld [vmem:[#allocation5 + $0x18] sm:$0xff]
    %vm82 = vcmask 261120
    %v84 = vsel %vm82, %v77, 0
    %v87 = vsel %vm82, %v78, 0
    %v90 = vsel %vm82, %v79, 0
    %v93 = vsel %vm82, %v80, 0
    %v96 = vsel %vm82, %v81, 0
    %98 = vmatpush.xpose.msra.mxu0 0.0
    %99 = vmatpush.xpose.msra.mxu0 0.0
    %100 = vmatpush.xpose.msra.mxu0 0.0
    %101 = vmatpush.xpose.msra.mxu0 0.0
    %102 = vmatpush.xpose.msra.mxu0 0.0
    %103 = vmatpush.xpose.msra.mxu0 0.0
    %104 = vmatpush.xpose.msra.mxu0 0.0
    %105 = vmatpush.xpose.msra.mxu0 0.0
    %106 = vmatpush.xpose.msra.mxu0 0.0
    %107 = vmatpush.xpose.msra.mxu0 0.0
    %108 = vmatpush.xpose.msra.mxu0 0.0
    %109 = vmatpush.xpose.msra.mxu0 0.0
    %110 = vmatpush.xpose.msra.mxu0 %v96
    %111 = vmatpush.xpose.msra.mxu0 %v93
    %112 = vmatpush.xpose.msra.mxu0 %v90
    %113 = vmatpush.xpose.msra.mxu0 %v87
    %114 = vmatmul.f32.gmra.mxu0 %v84
    %v115 = vpop.f32.mrf.mxu0
    %v116 = vadd.f32 0.0, %v115
    %117 = vdwg.mxu0
    %v118 = vsel %vm82, %v116, 0.0
    %v119 = vrot.slane %v118, 4
    %v120 = vadd.f32 %v118, %v119
    %v121 = vrot.slane %v120, 2
    %v122 = vadd.f32 %v120, %v121
    %v123 = vrot.slane %v122, 1
    %v124 = vadd.f32 %v122, %v123
    %v125 = vmul.f32 %v116, %v116
    %v126 = vsel %vm82, %v125, 0.0
    %v127 = vrot.slane %v126, 4
    %v128 = vadd.f32 %v126, %v127
    %v129 = vrot.slane %v128, 2
    %v130 = vadd.f32 %v128, %v129
    %v131 = vrot.slane %v130, 1
    %v132 = vadd.f32 %v130, %v131
    %v133 = vmul.f32 %v124, 0.125
    %v134 = vmul.f32 %v132, 0.125
    %v135 = vmul.f32 %v133, %v133
    %v136 = vsub.f32 %v134, %v135
    %v137 = vadd.f32 %v136, 1e-05
    %v138 = vrsqrt.pop %v137
    %v139 = vmul.f32 %v138, %v137
    %v140 = vmul.f32 %v139, %v138
    %v141 = vmul.f32 0.5, %v140
    %v142 = vsub.f32 1.5, %v141
    %v143 = vmul.f32 %v138, %v142
    %vm144 = vweird.f32 %v137
    %vm145 = vweird.f32 %v138
    %vm146 = vmor %vm144, %vm145
    %v147 = vsel %vm146, %v138, %v143
    %v148 = vld [vmem:[#allocation8] sm:$0x1]
    %v149 = vld [vmem:[#allocation8 + $0x1] sm:$0x1]
    %v150 = vld [vmem:[#allocation8 + $0x2] sm:$0x1]
    %v151 = vmul.f32 %v147, %v148
    %v152 = vsub.f32 %v116, %v133
    %v153 = vperm.slane %v151, 0
    %v154 = vmul.f32 %v152, %v153
    %v155 = vperm.slane %v149, 0
    %v156 = vadd.f32 %v154, %v155
    %v157 = vtanh.pop %v156
    %v158 = vld [vmem:[#allocation7] sm:$0xff]
    %v159 = vld [vmem:[#allocation7 + $0x8] sm:$0xff]
    %v160 = vperm.slane %v150, 0
    %v162 = vsel %vm82, %v157, 0
    %v165 = vsel %vm82, %v158, 0
    %v168 = vsel %vm82, %v159, 0
    %170 = vmatpush.xpose.msra.mxu0 0.0
    %171 = vmatpush.xpose.msra.mxu0 0.0
    %172 = vmatpush.xpose.msra.mxu0 0.0
    %173 = vmatpush.xpose.msra.mxu0 0.0
    %174 = vmatpush.xpose.msra.mxu0 0.0
    %175 = vmatpush.xpose.msra.mxu0 0.0
    %176 = vmatpush.xpose.msra.mxu0 0.0
    %177 = vmatpush.xpose.msra.mxu0 0.0
    %178 = vmatpush.xpose.msra.mxu0 0.0
    %179 = vmatpush.xpose.msra.mxu0 0.0
    %180 = vmatpush.xpose.msra.mxu0 0.0
    %181 = vmatpush.xpose.msra.mxu0 0.0
    %182 = vmatpush.xpose.msra.mxu0 0.0
    %183 = vmatpush.xpose.msra.mxu0 0.0
    %184 = vmatpush.xpose.msra.mxu0 %v168
    %185 = vmatpush.xpose.msra.mxu0 %v165
    %186 = vmatmul.f32.gmra.mxu0 %v162
    %v187 = vpop.f32.mrf.mxu0
    %v188 = vadd.f32 %v160, %v187
    %189 = vdwg.mxu0
    %v190 = vxor.u32 %v188, 2147483648
    %v191 = vmul.f32 %v190, 1.442695
    %v192 = vpow.pop %v191
    %v193 = vadd.f32 %v192, 1.0
    %v194 = vrcp.pop %v193
    %v195 = vmul.f32 %v193, %v194
    %v196 = vsub.f32 1.0, %v195
    %v197 = vmul.f32 %v194, %v196
    %v198 = vadd.f32 %v194, %v197
    %vm199 = vweird.f32 %v193
    %vm200 = vweird.f32 %v194
    %vm201 = vmor %vm199, %vm200
    %v202 = vsel %vm201, %v194, %v198
    %v203 = vand.u32 2147483647, %v193
    %vm204 = vcmp.eq.f32.partialorder %v203, 8.507059e+37
    %v205 = vand.u32 %v193, 2147483648
    %v206 = vor.u32 1.1754944e-38, %v205
    %v207 = vsel %vm204, %v206, %v202
    %v208 = vmul.f32 1.0, %v207
    %vm209 = vcmask 130048
    %210 = vst.msk [vmem:[#allocation10] sm:$0xff] %vm209, %v208
    // Predicated region
    $region34: #{tpu_custom_call.1} parent=1 // pred_check
      _
    $region35: #{tpu_custom_call.1} parent=1 // pred_check_branch
      %212 = sbr.rel (0) target = $region37
    $region36: #{tpu_custom_call.1} parent=1 // pred_region
      %214 = vsyncadd [#allocation4], 0
      %s216 = sshll.u32 [#allocation10], 4
      %s217 = int_to_ptr.vmem [resolvable:$true] %s216
      %s218 = sshll.u32 %s4, 4
      %s219 = int_to_ptr.hbm [resolvable:$true] %s218
      %221 = dma.vmem_to_hbm [thread:$0]  %s217, 128, %s219, [#allocation4]
    $region37: #{tpu_custom_call.1} parent=1 // pred_fallthru
      _
    // Predicated region
    $region38: #{tpu_custom_call.1} parent=1 // pred_check
      _
    $region39: #{tpu_custom_call.1} parent=1 // pred_check_branch
      %223 = sbr.rel (0) target = $region41
    $region40: #{tpu_custom_call.1} parent=1 // pred_region
      %225 = dma.done [#allocation4], 128
    $region41: #{tpu_custom_call.1} parent=1 // pred_fallthru
      _
    %226 = vsyncpa [#allocation3], 1
    %227 = vsyncpa [#allocation6], 1
    %228 = vsyncpa [#allocation9], 1
    %229 = vsyncpa [#allocation4], 1

</llo_original>
